<compile_context>
chip_gen: v7x
topology: tpu7x:2x2x1
jax: 0.10.0
libtpu: 0.0.40
codegen_flags: <defaults>
</compile_context>

<pallas_src>
import jax
import jax.numpy as jnp
from jax.experimental import pallas as pl
from jax.experimental.pallas import tpu as pltpu


def _round_down(x, m):
    return (x // m) * m


def _round_up(x, m):
    return -(-x // m) * m


def _crop_geometry(H, W, crop_h, crop_w):
    """torchvision center-crop offsets + (8,128)-aligned HBM fetch window."""
    # torchvision offset convention (int(round(...)), banker's rounding).
    top = int(round((H - crop_h) / 2.0))
    left = int(round((W - crop_w) / 2.0))

    row0 = _round_down(top, 8)                       # sublane-aligned start
    row1 = min(H, _round_up(top + crop_h, 8))        # clip at array end is OK
    col0 = _round_down(left, 128)                    # lane-aligned start
    col1 = min(W, _round_up(left + crop_w, 128))
    return top, left, row0, row1 - row0, col0, col1 - col0


def _pick_plane_block(P, plane_fetch_bytes, plane_out_bytes,
                      vmem_budget_bytes=8 * 1024 * 1024):
    """Largest divisor of P whose working set (fetch buffer + double-buffered
    output block) fits the VMEM budget."""
    per_plane = plane_fetch_bytes + 2 * plane_out_bytes
    best = 1
    for d in range(1, P + 1):
        if P % d == 0 and d * per_plane <= vmem_budget_bytes:
            best = d
    return best


def center_crop_planes(x, size, *, plane_block=None):
    """Center-crop a stack of planes.

    x:    [P, H, W] array (any dtype; dtype is preserved).
    size: int or (crop_h, crop_w).
    Returns [P, crop_h, crop_w].
    """
    if isinstance(size, int):
        crop_h = crop_w = size
    else:
        crop_h, crop_w = size

    P, H, W = x.shape
    # TODO(synk): torchvision zero-pads when the crop is larger than the image;
    # that path is not implemented here (documented semantic divergence).
    assert crop_h <= H and crop_w <= W, "crop larger than image not supported"

    top, left, row0, rows_fetch, col0, cols_fetch = _crop_geometry(
        H, W, crop_h, crop_w)
    row_off = top - row0
    col_off = left - col0

    itemsize = jnp.dtype(x.dtype).itemsize
    if plane_block is None:
        plane_block = _pick_plane_block(
            P, rows_fetch * cols_fetch * itemsize, crop_h * crop_w * itemsize)
    assert P % plane_block == 0, "plane_block must divide the number of planes"
    num_blocks = P // plane_block

    def kernel(x_hbm, out_ref, buf, sem):
        i = pl.program_id(0)
        p0 = pl.multiple_of(i * plane_block, plane_block)
        # Fetch only the aligned superset of the crop window for this block of
        # planes: HBM -> VMEM.  (Row/col starts and extents are tile-aligned
        # except where clipped at the array end.)
        cp = pltpu.make_async_copy(
            x_hbm.at[pl.ds(p0, plane_block),
                     pl.ds(row0, rows_fetch),
                     pl.ds(col0, cols_fetch)],
            buf,
            sem.at[0])
        cp.start()
        cp.wait()
        # Trim the sub-tile residue in VMEM and hand the block to the
        # auto-pipelined output (its HBM writeback overlaps the next fetch).
        out_ref[...] = buf[:, row_off:row_off + crop_h,
                           col_off:col_off + crop_w]

    return pl.pallas_call(
        kernel,
        out_shape=jax.ShapeDtypeStruct((P, crop_h, crop_w), x.dtype),
        grid=(num_blocks,),
        in_specs=[pl.BlockSpec(memory_space=pl.ANY)],   # raw HBM ref, manual DMA
        out_specs=pl.BlockSpec((plane_block, crop_h, crop_w),
                               lambda i: (i, 0, 0)),
        scratch_shapes=[
            pltpu.VMEM((plane_block, rows_fetch, cols_fetch), x.dtype),
            pltpu.SemaphoreType.DMA((1,)),
        ],
        compiler_params=pltpu.CompilerParams(
            dimension_semantics=("parallel",)),
    )(x)


def group_center_crop_stacked(imgs, size):
    """imgs: [..., H, W] stacked images (e.g. [G, C, H, W]).  Crops the last
    two dims; leading dims and dtype are preserved.  Preferred fast path (no
    stacking copy)."""
    lead = imgs.shape[:-2]
    H, W = imgs.shape[-2:]
    planes = imgs.reshape((-1, H, W))          # free if contiguous
    cropped = center_crop_planes(planes, size)
    return cropped.reshape(lead + cropped.shape[-2:])


def group_center_crop(img_group, size):
    """JAX equivalent of GroupCenterCrop.forward.

    img_group: list/tuple of CHW arrays (same shape & dtype) — matches the
               nn.Module — or an already-stacked [G, C, H, W] array (preferred,
               avoids the stack copy).
    Returns a list of cropped CHW arrays for list input, else the stacked
    cropped array.
    """
    if isinstance(img_group, (list, tuple)):
        # One stack is unavoidable to batch the group into a single launch;
        # the kernel itself adds no further copies of the uncropped data.
        stacked = jnp.stack(list(img_group), axis=0)
        out = group_center_crop_stacked(stacked, size)
        return [out[g] for g in range(out.shape[0])]
    return group_center_crop_stacked(img_group, size)


if __name__ == "__main__":
    key = jax.random.PRNGKey(0)
    G, C, H, W = 2, 4, 16, 16

    def ref_crop(img, size):
        ch, cw = (size, size) if isinstance(size, int) else size
        t = int(round((img.shape[-2] - ch) / 2.0))
        l = int(round((img.shape[-1] - cw) / 2.0))
        return img[..., t:t + ch, l:l + cw]

    # 1) float32 group, square crop 16 -> 8, list API (matches the nn.Module).
    size = 8
    keys = jax.random.split(key, G)
    img_group = [jax.random.normal(k, (C, H, W), dtype=jnp.float32)
                 for k in keys]
    out_group = group_center_crop(img_group, size)
    out_group = [jax.block_until_ready(o) for o in out_group]
    for img, out in zip(img_group, out_group):
        assert out.shape == (C, size, size) and out.dtype == img.dtype
        assert jnp.array_equal(out, ref_crop(img, size))

    # 2) uint8 group, rectangular crop (16, 8), stacked API (source dtype
    #    preserved, no stack copy) with a multi-step grid (plane_block=2).
    k2 = jax.random.fold_in(key, 1)
    stacked_u8 = jax.random.randint(
        k2, (G, C, H, W), 0, 256, dtype=jnp.int32).astype(jnp.uint8)
    size2 = (16, 8)
    planes_u8 = stacked_u8.reshape(G * C, H, W)
    out_u8 = center_crop_planes(planes_u8, size2, plane_block=2)
    out_u8 = jax.block_until_ready(out_u8).reshape(G, C, *size2)
    assert out_u8.dtype == jnp.uint8
    assert jnp.array_equal(out_u8, ref_crop(stacked_u8, size2))

    print("KERNEL_OK")
</pallas_src>

<mosaic_0001>
module attributes {stable_mosaic.version = 11 : i64} {
  func.func @kernel(%arg0: i32, %arg1: memref<8x16x16xf32, #tpu.memory_space<any>>, %arg2: memref<8x8x8xf32, #tpu.memory_space<vmem>>, %arg3: memref<8x16x16xf32, #tpu.memory_space<vmem>>, %arg4: memref<1x!tpu.dma_semaphore, #tpu.memory_space<semaphore_mem>>) attributes {dimension_semantics = [#tpu.dimension_semantics<parallel>], iteration_bounds = array<i64: 1>, scalar_prefetch = 0 : i64, scratch_operands = 2 : i64, tpu.core_type = #tpu.core_type<tc>, window_params = [{}, {transform_indices = @transform_1, window_bounds = array<i64: 8, 8, 8>}]} {
    %c8_i32 = arith.constant 8 : i32
    %0 = arith.muli %arg0, %c8_i32 : i32
    %1 = tpu.assume_multiple %0, 8 : i32
    %c0_i32 = arith.constant 0 : i32
    %c0_i32_0 = arith.constant 0 : i32
    %c0_i32_1 = arith.constant 0 : i32
    %2 = tpu.memref_slice %arg1[%1, %c0_i32_0, %c0_i32_1] : memref<8x16x16xf32, #tpu.memory_space<any>> -> memref<8x16x16xf32, #tpu.memory_space<any>>
    %3 = tpu.memref_slice %arg4[%c0_i32] : memref<1x!tpu.dma_semaphore, #tpu.memory_space<semaphore_mem>> -> memref<1x!tpu.dma_semaphore, #tpu.memory_space<semaphore_mem>>
    %4 = tpu.memref_squeeze %3 : memref<1x!tpu.dma_semaphore, #tpu.memory_space<semaphore_mem>> -> memref<!tpu.dma_semaphore, #tpu.memory_space<semaphore_mem>>
    tpu.enqueue_dma source(%2 : memref<8x16x16xf32, #tpu.memory_space<any>>) target(%arg3 : memref<8x16x16xf32, #tpu.memory_space<vmem>>) target_semaphore(%4 : memref<!tpu.dma_semaphore, #tpu.memory_space<semaphore_mem>>)
    %c0_i32_2 = arith.constant 0 : i32
    %c0_i32_3 = arith.constant 0 : i32
    %c0_i32_4 = arith.constant 0 : i32
    %5 = tpu.memref_slice %arg1[%1, %c0_i32_3, %c0_i32_4] : memref<8x16x16xf32, #tpu.memory_space<any>> -> memref<8x16x16xf32, #tpu.memory_space<any>>
    %6 = tpu.memref_slice %arg4[%c0_i32_2] : memref<1x!tpu.dma_semaphore, #tpu.memory_space<semaphore_mem>> -> memref<1x!tpu.dma_semaphore, #tpu.memory_space<semaphore_mem>>
    %7 = tpu.memref_squeeze %6 : memref<1x!tpu.dma_semaphore, #tpu.memory_space<semaphore_mem>> -> memref<!tpu.dma_semaphore, #tpu.memory_space<semaphore_mem>>
    tpu.wait_dma2 semaphore(%7 : memref<!tpu.dma_semaphore, #tpu.memory_space<semaphore_mem>>) src(%5 : memref<8x16x16xf32, #tpu.memory_space<any>>) dst(%arg3 : memref<8x16x16xf32, #tpu.memory_space<vmem>>)
    %c0 = arith.constant 0 : index
    %c4 = arith.constant 4 : index
    %c4_5 = arith.constant 4 : index
    %8 = vector.load %arg3[%c0, %c4, %c4_5] : memref<8x16x16xf32, #tpu.memory_space<vmem>>, vector<8x8x8xf32>
    %c0_6 = arith.constant 0 : index
    %c0_7 = arith.constant 0 : index
    %c0_8 = arith.constant 0 : index
    %9 = vector.load %arg2[%c0_6, %c0_7, %c0_8] : memref<8x8x8xf32, #tpu.memory_space<vmem>>, vector<8x8x8xf32>
    tpu.vector_store %arg2[%c0_6, %c0_7, %c0_8], %8 {strides = array<i32>} : memref<8x8x8xf32, #tpu.memory_space<vmem>>, vector<8x8x8xf32>,
    return
  }
  func.func @transform_1(%arg0: i32) -> (i32, i32, i32) {
    %c0_i32 = arith.constant 0 : i32
    %c0_i32_0 = arith.constant 0 : i32
    %c0_i32_1 = arith.constant 0 : i32
    return %arg0, %c0_i32, %c0_i32_0 : i32, i32, i32
  }
}

</mosaic_0001>

<llo_original>
// kernel: tpu_custom_call.1
$region0: #{tpu_custom_call.1}
  #allocation0 [shape = 'u32[]', space=smem, size = 0x4, offset = 0x4, fixed_abs, tag = 'smem constant byte address 0x4 - core index']
  #allocation1 [shape = 'u32[144,128]{1,0:T(1,128)}', space=vmem, size = 0x12000, scoped, tag = 'internal scratch']
  #allocation2 [shape = 'f32[8,16,16]{2,1,0:T(8,128)}', space=vmem, size = 0x10000, scoped, tag = 'scratch operand']
  #allocation3 [shape = 's32[1]{0}', space=sflag, size = 0x4, scoped, tag = 'scratch operand']
  #allocation6 [shape = 's32[]', space=sflag, size = 0x4, offset = 0, fixed_abs, tag = 'sflag constant byte address 0x0 - dummy sync flag']
  #allocation7 [shape = 's32[]', space=sflag, size = 0x4, offset = 0, fixed_abs, tag = 'sflag constant byte address 0x0 - dummy sync flag']
  #allocation8 [shape = 'u32[]', space=smem, size = 0x4, offset = 0x44, fixed_abs, tag = 'smem constant byte address 0x44 - assertion arg 0']
  #allocation9 [shape = 'u32[]', space=smem, size = 0x4, offset = 0x48, fixed_abs, tag = 'smem constant byte address 0x48 - assertion arg 1']
  %s0 = inlined_call_operand.hbm [shape: f32[8,16,16], index: 0, kind: input, shape index: {}]
  %s1 = inlined_call_operand.hbm [shape: f32[8,8,8], index: 1, kind: output, shape index: {}]
  %s2 = sld [smem:[#allocation0]]
  $region14: #{tpu_custom_call.1} parent=0
    _
  %s4 = ssub.s32 1, %s2
  %s5 = scalar_select 0, %s4, %s2
  $region1: #{tpu_custom_call.1} parent=0
    #allocation4 [shape = 'u8[32768]{0}', space=vmem, size = 0x8000, scoped, tag = 'output window, operand 0, single buffered']
    #allocation5 [shape = 's32[1]{0}', space=sflag, size = 0x4, scoped, tag = 'scoped memory for tpu_custom_call.1']
    %6 = vsyncpa [#allocation5], 0
    %s7 = smul.u32 0, 8
    %s8 = smul.u32 %s7, 16
    %s9 = smul.addr %s8, 16
    %s10 = scalar_lea.hbm %s0, %s9
    // Predicated region
    $region2: #{tpu_custom_call.1} parent=1 // pred_check
      _
    $region3: #{tpu_custom_call.1} parent=1 // pred_check_branch
      %12 = sbr.rel target = $region5
    $region4: #{tpu_custom_call.1} parent=1 // pred_region
      %13 = sst [smem:[#allocation8]] [#allocation7]
      %14 = sst [smem:[#allocation9]] [#allocation6]
    $region5: #{tpu_custom_call.1} parent=1 // pred_fallthru
      _
    %16 = shalt.err (0)
    %s18 = sshll.u32 [#allocation2], 4
    %s19 = int_to_ptr.vmem [resolvable:$true] %s18
    %21 = dma.hbm_to_vmem [thread:$0]  %s10, 2048, %s19, [#allocation3]
    %s22 = smul.u32 8, 16
    %s23 = smul.u32 %s22, 1
    %s24 = sshll.u32 %s23, 4
    %25 = dma.done [#allocation3], %s24
    %v26 = vld [vmem:[#allocation2 + $0x4] sm:$0xff]
    %v27 = vld [vmem:[#allocation2 + $0x14] sm:$0xff]
    %v28 = vld [vmem:[#allocation2 + $0x24] sm:$0xff]
    %v29 = vld [vmem:[#allocation2 + $0x34] sm:$0xff]
    %v30 = vld [vmem:[#allocation2 + $0x44] sm:$0xff]
    %v31 = vld [vmem:[#allocation2 + $0x54] sm:$0xff]
    %v32 = vld [vmem:[#allocation2 + $0x64] sm:$0xff]
    %v33 = vld [vmem:[#allocation2 + $0x74] sm:$0xff]
    %42 = vrot.lane.b32.xlu0 %v26, 124
    %v43 = vpop.permute.xlu0 %42
    %44 = vrot.lane.b32.xlu0 %v27, 124
    %v45 = vpop.permute.xlu0 %44
    %46 = vrot.lane.b32.xlu0 %v28, 124
    %v47 = vpop.permute.xlu0 %46
    %48 = vrot.lane.b32.xlu0 %v29, 124
    %v49 = vpop.permute.xlu0 %48
    %50 = vrot.lane.b32.xlu0 %v30, 124
    %v51 = vpop.permute.xlu0 %50
    %52 = vrot.lane.b32.xlu0 %v31, 124
    %v53 = vpop.permute.xlu0 %52
    %54 = vrot.lane.b32.xlu0 %v32, 124
    %v55 = vpop.permute.xlu0 %54
    %56 = vrot.lane.b32.xlu0 %v33, 124
    %v57 = vpop.permute.xlu0 %56
    %vm66 = vcmask 64512
    %67 = vst.msk [vmem:[#allocation4] sm:$0xff] %vm66, %v43
    %68 = vst.msk [vmem:[#allocation4 + $0x8] sm:$0xff] %vm66, %v45
    %69 = vst.msk [vmem:[#allocation4 + $0x10] sm:$0xff] %vm66, %v47
    %70 = vst.msk [vmem:[#allocation4 + $0x18] sm:$0xff] %vm66, %v49
    %71 = vst.msk [vmem:[#allocation4 + $0x20] sm:$0xff] %vm66, %v51
    %72 = vst.msk [vmem:[#allocation4 + $0x28] sm:$0xff] %vm66, %v53
    %73 = vst.msk [vmem:[#allocation4 + $0x30] sm:$0xff] %vm66, %v55
    %74 = vst.msk [vmem:[#allocation4 + $0x38] sm:$0xff] %vm66, %v57
    // Predicated region
    $region6: #{tpu_custom_call.1} parent=1 // pred_check
      _
    $region7: #{tpu_custom_call.1} parent=1 // pred_check_branch
      %76 = sbr.rel (0) target = $region9
    $region8: #{tpu_custom_call.1} parent=1 // pred_region
      %s78 = ssub.s32 1024, 1024
      %79 = vsyncadd [#allocation5], %s78
      %s80 = sshll.u32 [#allocation4], 4
      %s81 = int_to_ptr.vmem [resolvable:$true] %s80
      %86 = dma.vmem_to_hbm [thread:$0]  %s81, 1024, %s1, [#allocation5], 128, 128, 8
    $region9: #{tpu_custom_call.1} parent=1 // pred_fallthru
      _
    // Predicated region
    $region10: #{tpu_custom_call.1} parent=1 // pred_check
      _
    $region11: #{tpu_custom_call.1} parent=1 // pred_check_branch
      %88 = sbr.rel (0) target = $region13
    $region12: #{tpu_custom_call.1} parent=1 // pred_region
      %89 = dma.done [#allocation5], 1024
    $region13: #{tpu_custom_call.1} parent=1 // pred_fallthru
      _
    %90 = vsyncpa [#allocation5], 1
  %91 = vsyncmov [#allocation3]
  %s92 = vpop.sfrf %91
  %p93 = scmp.eq.s32.totalorder %s92, 0
  %p94 = pneg %p93
  %96 = shalt.err (%p94)

</llo_original>
